<compile_context>
chip_gen: v7x
topology: tpu7x:2x2x1
jax: 0.10.0
libtpu: 0.0.40
codegen_flags: <defaults>
</compile_context>

<pallas_src>
import jax
import jax.numpy as jnp
from jax.experimental import pallas as pl
from jax.experimental.pallas import tpu as pltpu


# ----------------------------- Pallas kernel --------------------------------
def _upsample_fused_kernel(x_ref, w1_ref, w2_ref, b_ref, o_ref):
    # x_ref : (R, 2*W*Cin)    R = B_blk*H rows; lane-concat [x[m] | x[m+1]] (0-padded)
    # w1_ref: (2*W*Cin, 2*n_mid)   [[A1, A2], [0, A0]]   (ConvTranspose, phase-major cols)
    # w2_ref: (4*n_mid, 2*n_out)   [[B0,0],[B1,B0],[B2,B1],[0,B2]]  (Conv2d, phase-major)
    # b_ref : (H, 2*n_out)    fused bias plane (bt propagated through conv2 + bc)
    # o_ref : (R, 2*n_out)    phase-major output [z_even | z_odd]
    rows = x_ref.shape[0]
    h = b_ref.shape[0]
    n_mid = w1_ref.shape[1] // 2
    n_out2 = o_ref.shape[1]

    # --- ConvTranspose2d(k=3, s=2, p=1, op=1), row-parity form: one MXU dot ---
    y = jnp.dot(x_ref[...], w1_ref[...], preferred_element_type=jnp.float32)
    y_e = y[:, :n_mid]          # even output rows (bias-free)
    y_o = y[:, n_mid:]          # odd output rows (bias-free)

    # Row-shifted copies, masked at per-image boundaries (row % H).
    row = jax.lax.broadcasted_iota(jnp.int32, (rows, n_mid), 0)
    r_mod = jax.lax.rem(row, h)
    y_o_dn = jnp.where(r_mod == 0, 0.0, pltpu.roll(y_o, shift=1, axis=0))         # y_odd[m-1]
    y_e_up = jnp.where(r_mod == h - 1, 0.0, pltpu.roll(y_e, shift=rows - 1, axis=0))  # y_even[m+1]

    # --- Conv2d(k=3, s=1, p=1), phase-decomposed: one MXU dot (K = 4*n_mid) ---
    lhs = jnp.concatenate([y_o_dn, y_e, y_o, y_e_up], axis=1)
    z = jnp.dot(lhs, w2_ref[...], preferred_element_type=jnp.float32)

    # Fused bias plane, broadcast over the images in this block.
    z = z.reshape(rows // h, h, n_out2) + b_ref[...][None]
    o_ref[...] = z.reshape(rows, n_out2).astype(o_ref.dtype)


# --------------------- one-time weight folding (hoisted) ---------------------
def prepare_params(params, H, W):
    """Fold PyTorch-layout weights into phase-stacked banded operators + bias plane.

    Call ONCE (outside the jitted forward). Returns arrays consumed by
    upsample_layer: everything here is weight-shaped, never rebuilt per call.
    """
    f32 = jnp.float32
    wt = params["wt"].astype(f32)        # (Cin, Cmid, 3, 3)  ConvTranspose2d layout
    bt = params["bt"].astype(f32)        # (Cmid,)
    wc = params["wc"].astype(f32)        # (Cout, Cmid, 3, 3) Conv2d layout
    bc = params["bc"].astype(f32)        # (Cout,)
    Cin, Cmid = wt.shape[0], wt.shape[1]
    Cout = wc.shape[0]

    ox = jnp.arange(2 * W)

    # Banded ConvTranspose column operator:
    #   A[ky][ix*Cin+ci, ox*Cmid+co] = wt[ci, co, ky, ox - 2*ix + 1]  (0<=kx<=2)
    kx = ox[None, :] - 2 * jnp.arange(W)[:, None] + 1                 # (W, 2W)
    sel_t = (kx[:, :, None] == jnp.arange(3)).astype(f32)             # (W, 2W, 3)
    A = jnp.einsum("wxk,ioyk->ywixo", sel_t, wt).reshape(3, W * Cin, 2 * W * Cmid)

    # Banded Conv2d column operator:
    #   Bm[dy][a*Cmid+ci, x*Cout+co] = wc[co, ci, dy, a - x + 1]      (0<=dx<=2)
    dxm = ox[:, None] - ox[None, :] + 1                               # (2W, 2W)
    sel_c = (dxm[:, :, None] == jnp.arange(3)).astype(f32)            # (2W, 2W, 3)
    Bm = jnp.einsum("axd,oiyd->yaixo", sel_c, wc).reshape(
        3, 2 * W * Cmid, 2 * W * Cout)

    n_mid = 2 * W * Cmid
    n_out = 2 * W * Cout

    # Phase-stacked first-conv operator:  [x[m] | x[m+1]] @ W1 = [y_even | y_odd]
    zA = jnp.zeros_like(A[0])
    w1 = jnp.concatenate(
        [jnp.concatenate([A[1], A[2]], axis=1),
         jnp.concatenate([zA, A[0]], axis=1)], axis=0)                # (2*W*Cin, 2*n_mid)

    # Phase-stacked second-conv operator:
    #   [y_odd[m-1] | y_even[m] | y_odd[m] | y_even[m+1]] @ W2 = [z_even | z_odd]
    zB = jnp.zeros_like(Bm[0])
    w2 = jnp.concatenate(
        [jnp.concatenate([Bm[0], zB], axis=1),
         jnp.concatenate([Bm[1], Bm[0]], axis=1),
         jnp.concatenate([Bm[2], Bm[1]], axis=1),
         jnp.concatenate([zB, Bm[2]], axis=1)], axis=0)               # (4*n_mid, 2*n_out)

    # Fused bias plane: ConvTranspose bias propagated through the 3x3 taps
    # (with correct first/last output-row boundary handling) plus Conv2d bias.
    bt_t = jnp.tile(bt, 2 * W)                                        # (n_mid,)
    bc_t = jnp.tile(bc, 2 * W)                                        # (n_out,)
    s_all = bt_t @ (Bm[0] + Bm[1] + Bm[2])
    s_top = bt_t @ (Bm[1] + Bm[2])       # output row 0      (even phase, m = 0)
    s_bot = bt_t @ (Bm[0] + Bm[1])       # output row 2H-1   (odd phase,  m = H-1)
    bias_e = jnp.tile(s_all, (H, 1)).at[0].set(s_top) + bc_t          # (H, n_out)
    bias_o = jnp.tile(s_all, (H, 1)).at[H - 1].set(s_bot) + bc_t      # (H, n_out)
    bias_plane = jnp.concatenate([bias_e, bias_o], axis=1)            # (H, 2*n_out)

    return {"w1": w1, "w2": w2, "bias": bias_plane}


def _default_grid_blocks(batch):
    """One grid step per TensorCore: 1 on v5e/v6e, 2 on dual-TC chips (v7x)."""
    n_tc = 1
    try:
        if "v7" in jax.devices()[0].device_kind.lower():
            n_tc = 2
    except Exception:
        n_tc = 1
    return n_tc if (n_tc > 1 and batch % n_tc == 0) else 1


# ------------------------------- forward -------------------------------------
def upsample_layer(x_nchw, prepped, *, grid_blocks=None):
    """Forward pass of UpSampleLayer. Input/output are NCHW (PyTorch layout)."""
    B, Cin, H, W = x_nchw.shape
    f32 = jnp.float32
    w1, w2, bias_plane = prepped["w1"], prepped["w2"], prepped["bias"]
    assert w1.shape[0] == 2 * W * Cin
    n_out = w2.shape[1] // 2
    Cout = n_out // (2 * W)

    if grid_blocks is None:
        grid_blocks = _default_grid_blocks(B)
    assert B % grid_blocks == 0
    rows_blk = (B // grid_blocks) * H

    # NCHW -> lane-dense rows [x[m] | x[m+1]] (per-image shift, zero-padded).
    x = jnp.transpose(x_nchw, (0, 2, 3, 1)).reshape(B, H, W * Cin).astype(f32)
    x_dn = jnp.concatenate([x[:, 1:], jnp.zeros((B, 1, W * Cin), f32)], axis=1)
    x_cat = jnp.concatenate([x, x_dn], axis=-1).reshape(B * H, 2 * W * Cin)

    flops = 2 * B * H * (w1.shape[0] * w1.shape[1] + w2.shape[0] * w2.shape[1])
    bytes_acc = 4 * (x_cat.size + w1.size + w2.size + bias_plane.size
                     + B * H * 2 * n_out)

    out = pl.pallas_call(
        _upsample_fused_kernel,
        out_shape=jax.ShapeDtypeStruct((B * H, 2 * n_out), f32),
        grid=(grid_blocks,),
        in_specs=[
            pl.BlockSpec((rows_blk, 2 * W * Cin), lambda i: (i, 0)),
            pl.BlockSpec(w1.shape, lambda i: (0, 0)),
            pl.BlockSpec(w2.shape, lambda i: (0, 0)),
            pl.BlockSpec(bias_plane.shape, lambda i: (0, 0)),
        ],
        out_specs=pl.BlockSpec((rows_blk, 2 * n_out), lambda i: (i, 0)),
        compiler_params=pltpu.CompilerParams(
            dimension_semantics=("parallel",)),
        cost_estimate=pl.CostEstimate(
            flops=flops, transcendentals=0, bytes_accessed=bytes_acc),
    )(x_cat, w1, w2, bias_plane)

    # Phase-major (B*H, [z_even | z_odd]) -> NCHW (layout plumbing in wrapper).
    z = out.reshape(B, H, 2, 2 * W, Cout)
    return jnp.transpose(z, (0, 4, 1, 2, 3)).reshape(B, Cout, 2 * H, 2 * W)


def init_params(key, in_ch, out_ch):
    k1, k2, k3, k4 = jax.random.split(key, 4)
    return {
        # PyTorch ConvTranspose2d weight: (in_ch, out_ch, kH, kW)
        "wt": jax.random.normal(k1, (in_ch, out_ch, 3, 3), jnp.float32) * 0.1,
        "bt": jax.random.normal(k2, (out_ch,), jnp.float32) * 0.1,
        # PyTorch Conv2d weight: (out_ch, in_ch=out_ch, kH, kW)
        "wc": jax.random.normal(k3, (out_ch, out_ch, 3, 3), jnp.float32) * 0.1,
        "bc": jax.random.normal(k4, (out_ch,), jnp.float32) * 0.1,
    }


# ------------------------------ reference -----------------------------------
def reference_forward(x_nchw, params):
    w_t = params["wt"]
    # ConvTranspose2d == conv_general_dilated with lhs_dilation + flipped weight
    w_flip = jnp.transpose(w_t[:, :, ::-1, ::-1], (1, 0, 2, 3))  # (out_ch, in_ch, 3, 3)
    y = jax.lax.conv_general_dilated(
        x_nchw, w_flip, window_strides=(1, 1), padding=[(1, 2), (1, 2)],
        lhs_dilation=(2, 2), dimension_numbers=("NCHW", "OIHW", "NCHW"))
    y = y + params["bt"][None, :, None, None]
    z = jax.lax.conv_general_dilated(
        y, params["wc"], window_strides=(1, 1), padding=[(1, 1), (1, 1)],
        dimension_numbers=("NCHW", "OIHW", "NCHW"))
    z = z + params["bc"][None, :, None, None]
    return z


# --------------------------------- main --------------------------------------
if __name__ == "__main__":
    B, IN_CH, OUT_CH, H, W = 2, 4, 4, 16, 16

    key = jax.random.PRNGKey(0)
    k_x, k_p = jax.random.split(key)
    x = jax.random.normal(k_x, (B, IN_CH, H, W), jnp.float32)
    params = init_params(k_p, IN_CH, OUT_CH)

    # One-time weight folding (hoisted out of the per-call forward path).
    prepped = prepare_params(params, H, W)

    fwd = jax.jit(upsample_layer, static_argnames=("grid_blocks",))
    out = jax.block_until_ready(fwd(x, prepped))

    assert out.shape == (B, OUT_CH, 2 * H, 2 * W), out.shape

    ref = jax.block_until_ready(reference_forward(x, params))
    assert jnp.allclose(out, ref, atol=1e-4, rtol=1e-4), (
        float(jnp.max(jnp.abs(out - ref))))

    print("KERNEL_OK")
</pallas_src>

<mosaic_0001>
module attributes {stable_mosaic.version = 11 : i64} {
  func.func @_upsample_fused_kernel(%arg0: i32, %arg1: memref<32x128xf32, #tpu.memory_space<vmem>>, %arg2: memref<128x256xf32, #tpu.memory_space<vmem>>, %arg3: memref<512x256xf32, #tpu.memory_space<vmem>>, %arg4: memref<16x256xf32, #tpu.memory_space<vmem>>, %arg5: memref<32x256xf32, #tpu.memory_space<vmem>>) attributes {dimension_semantics = [#tpu.dimension_semantics<parallel>], iteration_bounds = array<i64: 1>, scalar_prefetch = 0 : i64, scratch_operands = 0 : i64, tpu.core_type = #tpu.core_type<tc>, window_params = [{transform_indices = @transform_0, window_bounds = array<i64: 32, 128>}, {pipeline_mode = #tpu.pipeline_mode<synchronous>, transform_indices = @transform_1, window_bounds = array<i64: 128, 256>}, {pipeline_mode = #tpu.pipeline_mode<synchronous>, transform_indices = @transform_2, window_bounds = array<i64: 512, 256>}, {pipeline_mode = #tpu.pipeline_mode<synchronous>, transform_indices = @transform_3, window_bounds = array<i64: 16, 256>}, {transform_indices = @transform_4, window_bounds = array<i64: 32, 256>}]} {
    %c0 = arith.constant 0 : index
    %c0_0 = arith.constant 0 : index
    %0 = vector.load %arg1[%c0, %c0_0] : memref<32x128xf32, #tpu.memory_space<vmem>>, vector<32x128xf32>
    %c0_1 = arith.constant 0 : index
    %c0_2 = arith.constant 0 : index
    %1 = vector.load %arg2[%c0_1, %c0_2] : memref<128x256xf32, #tpu.memory_space<vmem>>, vector<128x256xf32>
    %cst = arith.constant dense<0.000000e+00> : vector<32x256xf32>
    %2 = tpu.matmul %0, %1, %cst {dimension_numbers = #tpu.dot_dimension_numbers<[1], [0], [0], [1], [0, 0, 1, 1], [], []>} : vector<32x128xf32>, vector<128x256xf32>, vector<32x256xf32> -> vector<32x256xf32>
    %3 = vector.extract_strided_slice %2 {offsets = [0, 0], sizes = [32, 128], strides = [1, 1]} : vector<32x256xf32> to vector<32x128xf32>
    %4 = vector.extract_strided_slice %2 {offsets = [0, 128], sizes = [32, 128], strides = [1, 1]} : vector<32x256xf32> to vector<32x128xf32>
    %5 = tpu.iota {dimensions = array<i32: 0>} : vector<32x128xi32>
    %c16_i32 = arith.constant 16 : i32
    %6 = vector.broadcast %c16_i32 : i32 to vector<32x128xi32>
    %7 = arith.remsi %5, %6 : vector<32x128xi32>
    %c0_i32 = arith.constant 0 : i32
    %8 = vector.broadcast %c0_i32 : i32 to vector<32x128xi32>
    %9 = arith.cmpi eq, %7, %8 : vector<32x128xi32>
    %c1_i32 = arith.constant 1 : i32
    %10 = tpu.dynamic_rotate %4 by %c1_i32 dim 0 : vector<32x128xf32>, i32 -> vector<32x128xf32>
    %cst_3 = arith.constant 0.000000e+00 : f32
    %11 = vector.broadcast %cst_3 : f32 to vector<32x128xf32>
    %12 = arith.select %9, %11, %10 : vector<32x128xi1>, vector<32x128xf32>
    %c15_i32 = arith.constant 15 : i32
    %13 = vector.broadcast %c15_i32 : i32 to vector<32x128xi32>
    %14 = arith.cmpi eq, %7, %13 : vector<32x128xi32>
    %c31_i32 = arith.constant 31 : i32
    %15 = tpu.dynamic_rotate %3 by %c31_i32 dim 0 : vector<32x128xf32>, i32 -> vector<32x128xf32>
    %cst_4 = arith.constant 0.000000e+00 : f32
    %16 = vector.broadcast %cst_4 : f32 to vector<32x128xf32>
    %17 = arith.select %14, %16, %15 : vector<32x128xi1>, vector<32x128xf32>
    %18 = tpu.concatenate %12, %3, %4, %17 in 1 : vector<32x128xf32>, vector<32x128xf32>, vector<32x128xf32>, vector<32x128xf32> -> vector<32x512xf32>
    %c0_5 = arith.constant 0 : index
    %c0_6 = arith.constant 0 : index
    %19 = vector.load %arg3[%c0_5, %c0_6] : memref<512x256xf32, #tpu.memory_space<vmem>>, vector<512x256xf32>
    %cst_7 = arith.constant dense<0.000000e+00> : vector<32x256xf32>
    %20 = tpu.matmul %18, %19, %cst_7 {dimension_numbers = #tpu.dot_dimension_numbers<[1], [0], [0], [1], [0, 0, 1, 1], [], []>} : vector<32x512xf32>, vector<512x256xf32>, vector<32x256xf32> -> vector<32x256xf32>
    %21 = vector.shape_cast %20 : vector<32x256xf32> to vector<2x16x256xf32>
    %c0_8 = arith.constant 0 : index
    %c0_9 = arith.constant 0 : index
    %22 = vector.load %arg4[%c0_8, %c0_9] : memref<16x256xf32, #tpu.memory_space<vmem>>, vector<16x256xf32>
    %23 = vector.shape_cast %22 : vector<16x256xf32> to vector<1x16x256xf32>
    %24 = vector.broadcast %23 : vector<1x16x256xf32> to vector<2x16x256xf32>
    %25 = arith.addf %21, %24 : vector<2x16x256xf32>
    %26 = vector.shape_cast %25 : vector<2x16x256xf32> to vector<32x256xf32>
    %c0_10 = arith.constant 0 : index
    %c0_11 = arith.constant 0 : index
    %27 = vector.load %arg5[%c0_10, %c0_11] : memref<32x256xf32, #tpu.memory_space<vmem>>, vector<32x256xf32>
    tpu.vector_store %arg5[%c0_10, %c0_11], %26 {strides = array<i32>} : memref<32x256xf32, #tpu.memory_space<vmem>>, vector<32x256xf32>,
    return
  }
  func.func @transform_0(%arg0: i32) -> (i32, i32) {
    %c0_i32 = arith.constant 0 : i32
    %c0_i32_0 = arith.constant 0 : i32
    return %arg0, %c0_i32 : i32, i32
  }
  func.func @transform_1(%arg0: i32) -> (i32, i32) {
    %c0_i32 = arith.constant 0 : i32
    %c0_i32_0 = arith.constant 0 : i32
    %c0_i32_1 = arith.constant 0 : i32
    return %c0_i32, %c0_i32_0 : i32, i32
  }
  func.func @transform_2(%arg0: i32) -> (i32, i32) {
    %c0_i32 = arith.constant 0 : i32
    %c0_i32_0 = arith.constant 0 : i32
    %c0_i32_1 = arith.constant 0 : i32
    return %c0_i32, %c0_i32_0 : i32, i32
  }
  func.func @transform_3(%arg0: i32) -> (i32, i32) {
    %c0_i32 = arith.constant 0 : i32
    %c0_i32_0 = arith.constant 0 : i32
    %c0_i32_1 = arith.constant 0 : i32
    return %c0_i32, %c0_i32_0 : i32, i32
  }
  func.func @transform_4(%arg0: i32) -> (i32, i32) {
    %c0_i32 = arith.constant 0 : i32
    %c0_i32_0 = arith.constant 0 : i32
    return %arg0, %c0_i32 : i32, i32
  }
}

</mosaic_0001>

<llo_original>
// kernel: upsample_layer.1
$region0: #{upsample_layer.1}
  #allocation0 [shape = 'u32[]', space=smem, size = 0x4, offset = 0x4, fixed_abs, tag = 'smem constant byte address 0x4 - core index']
  #allocation1 [shape = 'u32[144,128]{1,0:T(1,128)}', space=vmem, size = 0x12000, scoped, tag = 'internal scratch']
  %s0 = inlined_call_operand.vmem [shape: f32[32,128], index: 0, kind: input, shape index: {}]
  %s1 = inlined_call_operand.vmem [shape: f32[128,256], index: 1, kind: input, shape index: {}]
  %s2 = inlined_call_operand.vmem [shape: f32[512,256], index: 2, kind: input, shape index: {}]
  %s3 = inlined_call_operand.vmem [shape: f32[16,256], index: 3, kind: input, shape index: {}]
  %s4 = inlined_call_operand.vmem [shape: f32[32,256], index: 4, kind: output, shape index: {}]
  %s5 = sld [smem:[#allocation0]]
  $region26: #{upsample_layer.1} parent=0
    _
  %s7 = ssub.s32 1, %s5
  %s8 = scalar_select 0, %s7, %s5
  // Predicated region
  $region2: #{upsample_layer.1} parent=0 // pred_check
    _
  $region3: #{upsample_layer.1} parent=0 // pred_check_branch
    %10 = sbr.rel (0) target = $region5
  $region4: #{upsample_layer.1} parent=0 // pred_region
    _
  $region5: #{upsample_layer.1} parent=0 // pred_fallthru
    _
  // Predicated region
  $region6: #{upsample_layer.1} parent=0 // pred_check
    _
  $region7: #{upsample_layer.1} parent=0 // pred_check_branch
    %12 = sbr.rel (0) target = $region9
  $region8: #{upsample_layer.1} parent=0 // pred_region
    _
  $region9: #{upsample_layer.1} parent=0 // pred_fallthru
    _
  // Predicated region
  $region10: #{upsample_layer.1} parent=0 // pred_check
    _
  $region11: #{upsample_layer.1} parent=0 // pred_check_branch
    %14 = sbr.rel (0) target = $region13
  $region12: #{upsample_layer.1} parent=0 // pred_region
    _
  $region13: #{upsample_layer.1} parent=0 // pred_fallthru
    _
  // Predicated region
  $region14: #{upsample_layer.1} parent=0 // pred_check
    _
  $region15: #{upsample_layer.1} parent=0 // pred_check_branch
    %16 = sbr.rel (0) target = $region17
  $region16: #{upsample_layer.1} parent=0 // pred_region
    _
  $region17: #{upsample_layer.1} parent=0 // pred_fallthru
    _
  %v17 = vld [vmem:[%s0] sm:$0xff]
  %v18 = vld [vmem:[%s0 + $0x8] sm:$0xff]
  %v19 = vld [vmem:[%s0 + $0x10] sm:$0xff]
  %v20 = vld [vmem:[%s0 + $0x18] sm:$0xff]
  %v21 = vld [vmem:[%s1] sm:$0xff]
  %v22 = vld [vmem:[%s1 + $0x8] sm:$0xff]
  %v23 = vld [vmem:[%s1 + $0x10] sm:$0xff]
  %v24 = vld [vmem:[%s1 + $0x18] sm:$0xff]
  %v25 = vld [vmem:[%s1 + $0x20] sm:$0xff]
  %v26 = vld [vmem:[%s1 + $0x28] sm:$0xff]
  %v27 = vld [vmem:[%s1 + $0x30] sm:$0xff]
  %v28 = vld [vmem:[%s1 + $0x38] sm:$0xff]
  %v29 = vld [vmem:[%s1 + $0x40] sm:$0xff]
  %v30 = vld [vmem:[%s1 + $0x48] sm:$0xff]
  %v31 = vld [vmem:[%s1 + $0x50] sm:$0xff]
  %v32 = vld [vmem:[%s1 + $0x58] sm:$0xff]
  %v33 = vld [vmem:[%s1 + $0x60] sm:$0xff]
  %v34 = vld [vmem:[%s1 + $0x68] sm:$0xff]
  %v35 = vld [vmem:[%s1 + $0x70] sm:$0xff]
  %v36 = vld [vmem:[%s1 + $0x78] sm:$0xff]
  %v37 = vld [vmem:[%s1 + $0x80] sm:$0xff]
  %v38 = vld [vmem:[%s1 + $0x88] sm:$0xff]
  %v39 = vld [vmem:[%s1 + $0x90] sm:$0xff]
  %v40 = vld [vmem:[%s1 + $0x98] sm:$0xff]
  %v41 = vld [vmem:[%s1 + $0xa0] sm:$0xff]
  %v42 = vld [vmem:[%s1 + $0xa8] sm:$0xff]
  %v43 = vld [vmem:[%s1 + $0xb0] sm:$0xff]
  %v44 = vld [vmem:[%s1 + $0xb8] sm:$0xff]
  %v45 = vld [vmem:[%s1 + $0xc0] sm:$0xff]
  %v46 = vld [vmem:[%s1 + $0xc8] sm:$0xff]
  %v47 = vld [vmem:[%s1 + $0xd0] sm:$0xff]
  %v48 = vld [vmem:[%s1 + $0xd8] sm:$0xff]
  %v49 = vld [vmem:[%s1 + $0xe0] sm:$0xff]
  %v50 = vld [vmem:[%s1 + $0xe8] sm:$0xff]
  %v51 = vld [vmem:[%s1 + $0xf0] sm:$0xff]
  %v52 = vld [vmem:[%s1 + $0xf8] sm:$0xff]
  %53 = vmatprep.subr.mxu0 %v22
  %54 = vmatpush1.msra.mxu0 %v21
  %55 = vmatprep.subr.mxu0 %v24
  %56 = vmatpush1.msra.mxu0 %v23
  %57 = vmatprep.subr.mxu0 %v26
  %58 = vmatpush1.msra.mxu0 %v25
  %59 = vmatprep.subr.mxu0 %v28
  %60 = vmatpush1.msra.mxu0 %v27
  %61 = vmatprep.subr.mxu0 %v30
  %62 = vmatpush1.msra.mxu0 %v29
  %63 = vmatprep.subr.mxu0 %v32
  %64 = vmatpush1.msra.mxu0 %v31
  %65 = vmatprep.subr.mxu0 %v34
  %66 = vmatpush1.msra.mxu0 %v33
  %67 = vmatprep.subr.mxu0 %v36
  %68 = vmatpush1.msra.mxu0 %v35
  %69 = vmatprep.subr.mxu0 %v38
  %70 = vmatpush1.msra.mxu0 %v37
  %71 = vmatprep.subr.mxu0 %v40
  %72 = vmatpush1.msra.mxu0 %v39
  %73 = vmatprep.subr.mxu0 %v42
  %74 = vmatpush1.msra.mxu0 %v41
  %75 = vmatprep.subr.mxu0 %v44
  %76 = vmatpush1.msra.mxu0 %v43
  %77 = vmatprep.subr.mxu0 %v46
  %78 = vmatpush1.msra.mxu0 %v45
  %79 = vmatprep.subr.mxu0 %v48
  %80 = vmatpush1.msra.mxu0 %v47
  %81 = vmatprep.subr.mxu0 %v50
  %82 = vmatpush1.msra.mxu0 %v49
  %83 = vmatprep.subr.mxu0 %v52
  %84 = vmatpush1.msra.mxu0 %v51
  %85 = vmatprep.subr.mxu0 0.0
  %86 = vmatpush1.msra.mxu0 0.0
  %87 = vmatprep.subr.mxu0 0.0
  %88 = vmatpush1.msra.mxu0 0.0
  %89 = vmatprep.subr.mxu0 0.0
  %90 = vmatpush1.msra.mxu0 0.0
  %91 = vmatprep.subr.mxu0 0.0
  %92 = vmatpush1.msra.mxu0 0.0
  %93 = vmatprep.subr.mxu0 0.0
  %94 = vmatpush1.msra.mxu0 0.0
  %95 = vmatprep.subr.mxu0 0.0
  %96 = vmatpush1.msra.mxu0 0.0
  %97 = vmatprep.subr.mxu0 0.0
  %98 = vmatpush1.msra.mxu0 0.0
  %99 = vmatprep.subr.mxu0 0.0
  %100 = vmatpush1.msra.mxu0 0.0
  %101 = vmatprep.subr.mxu0 0.0
  %102 = vmatpush1.msra.mxu0 0.0
  %103 = vmatprep.subr.mxu0 0.0
  %104 = vmatpush1.msra.mxu0 0.0
  %105 = vmatprep.subr.mxu0 0.0
  %106 = vmatpush1.msra.mxu0 0.0
  %107 = vmatprep.subr.mxu0 0.0
  %108 = vmatpush1.msra.mxu0 0.0
  %109 = vmatprep.subr.mxu0 0.0
  %110 = vmatpush1.msra.mxu0 0.0
  %111 = vmatprep.subr.mxu0 0.0
  %112 = vmatpush1.msra.mxu0 0.0
  %113 = vmatprep.subr.mxu0 0.0
  %114 = vmatpush1.msra.mxu0 0.0
  %115 = vmatprep.subr.mxu0 0.0
  %116 = vmatpush1.msra.mxu0 0.0
  %117 = vmatprep.mubr.f32.mxu0 0.0
  %118 = vmatmul.mubr.f32.gmra.mrb[0].mxu0 %v17
  %v119 = vpop.f32.mrb[0].mxu0
  %v120 = vadd.f32 0.0, %v119
  %v121 = vpop.f32.mrb[0].mxu0
  %v122 = vadd.f32 0.0, %v121
  %123 = vmatprep.mubr.f32.mxu0 0.0
  %124 = vmatmul.mubr.f32.gmra.mrb[0].mxu0 %v18
  %v125 = vpop.f32.mrb[0].mxu0
  %v126 = vadd.f32 0.0, %v125
  %v127 = vpop.f32.mrb[0].mxu0
  %v128 = vadd.f32 0.0, %v127
  %129 = vmatprep.mubr.f32.mxu0 0.0
  %130 = vmatmul.mubr.f32.gmra.mrb[0].mxu0 %v19
  %v131 = vpop.f32.mrb[0].mxu0
  %v132 = vadd.f32 0.0, %v131
  %v133 = vpop.f32.mrb[0].mxu0
  %v134 = vadd.f32 0.0, %v133
  %135 = vmatprep.mubr.f32.mxu0 0.0
  %136 = vmatmul.mubr.f32.gmra.mrb[0].mxu0 %v20
  %v137 = vpop.f32.mrb[0].mxu0
  %v138 = vadd.f32 0.0, %v137
  %v139 = vpop.f32.mrb[0].mxu0
  %v140 = vadd.f32 0.0, %v139
  %141 = vdwg.mxu0
  %v142 = vlaneseq
  %v143 = vshrl.u32 %v142, 7
  %v144 = vadd.s32 %v143, 8
  %v145 = vadd.s32 %v143, 16
  %v146 = vadd.s32 %v143, 24
  %vm147 = vcmp.lt.s32.totalorder %v143, 0
  %v148 = vsub.s32 0, %v143
  %v149 = vsel %vm147, %v148, %v143
  %v150 = vshrl.u32 %v149, 4
  %v151 = vand.u32 %v149, 15
  %v152 = vsub.s32 0, %v151
  %v153 = vsel %vm147, %v152, %v151
  %vm154 = vcmp.lt.s32.totalorder %v144, 0
  %v155 = vsub.s32 0, %v144
  %v156 = vsel %vm154, %v155, %v144
  %v157 = vshrl.u32 %v156, 4
  %v158 = vand.u32 %v156, 15
  %v159 = vsub.s32 0, %v158
  %v160 = vsel %vm154, %v159, %v158
  %vm161 = vcmp.lt.s32.totalorder %v145, 0
  %v162 = vsub.s32 0, %v145
  %v163 = vsel %vm161, %v162, %v145
  %v164 = vshrl.u32 %v163, 4
  %v165 = vand.u32 %v163, 15
  %v166 = vsub.s32 0, %v165
  %v167 = vsel %vm161, %v166, %v165
  %vm168 = vcmp.lt.s32.totalorder %v146, 0
  %v169 = vsub.s32 0, %v146
  %v170 = vsel %vm168, %v169, %v146
  %v171 = vshrl.u32 %v170, 4
  %v172 = vand.u32 %v170, 15
  %v173 = vsub.s32 0, %v172
  %v174 = vsel %vm168, %v173, %v172
  %vm175 = vcmp.eq.s32.totalorder %v153, 0
  %vm176 = vcmp.eq.s32.totalorder %v160, 0
  %vm177 = vcmp.eq.s32.totalorder %v167, 0
  %vm178 = vcmp.eq.s32.totalorder %v174, 0
  %v179 = vrot.slane %v122, 7
  %v180 = vrot.slane %v128, 7
  %v181 = vrot.slane %v134, 7
  %v182 = vrot.slane %v140, 7
  %vm183 = vcmp.lt.s32.totalorder %v143, 1
  %v184 = vsel %vm183, %v181, %v182
  %v185 = vsel %vm183, %v180, %v181
  %v186 = vsel %vm183, %v179, %v180
  %v187 = vsel %vm183, %v182, %v179
  %v188 = vsel %vm175, 0.0, %v187
  %v189 = vsel %vm176, 0.0, %v186
  %v190 = vsel %vm177, 0.0, %v185
  %v191 = vsel %vm178, 0.0, %v184
  %vm192 = vcmp.eq.s32.totalorder %v153, 15
  %vm193 = vcmp.eq.s32.totalorder %v160, 15
  %vm194 = vcmp.eq.s32.totalorder %v167, 15
  %vm195 = vcmp.eq.s32.totalorder %v174, 15
  %v196 = vrot.slane %v120, 1
  %v197 = vrot.slane %v126, 1
  %v198 = vrot.slane %v132, 1
  %v199 = vrot.slane %v138, 1
  %vm200 = vcmp.lt.s32.totalorder %v143, 7
  %v201 = vsel %vm200, %v198, %v199
  %v202 = vsel %vm200, %v197, %v198
  %v203 = vsel %vm200, %v196, %v197
  %v204 = vsel %vm200, %v199, %v196
  %v205 = vsel %vm192, 0.0, %v203
  %v206 = vsel %vm193, 0.0, %v202
  %v207 = vsel %vm194, 0.0, %v201
  %v208 = vsel %vm195, 0.0, %v204
  %v209 = vld [vmem:[%s2] sm:$0xff]
  %v210 = vld [vmem:[%s2 + $0x8] sm:$0xff]
  %v211 = vld [vmem:[%s2 + $0x10] sm:$0xff]
  %v212 = vld [vmem:[%s2 + $0x18] sm:$0xff]
  %v213 = vld [vmem:[%s2 + $0x20] sm:$0xff]
  %v214 = vld [vmem:[%s2 + $0x28] sm:$0xff]
  %v215 = vld [vmem:[%s2 + $0x30] sm:$0xff]
  %v216 = vld [vmem:[%s2 + $0x38] sm:$0xff]
  %v217 = vld [vmem:[%s2 + $0x40] sm:$0xff]
  %v218 = vld [vmem:[%s2 + $0x48] sm:$0xff]
  %v219 = vld [vmem:[%s2 + $0x50] sm:$0xff]
  %v220 = vld [vmem:[%s2 + $0x58] sm:$0xff]
  %v221 = vld [vmem:[%s2 + $0x60] sm:$0xff]
  %v222 = vld [vmem:[%s2 + $0x68] sm:$0xff]
  %v223 = vld [vmem:[%s2 + $0x70] sm:$0xff]
  %v224 = vld [vmem:[%s2 + $0x78] sm:$0xff]
  %v225 = vld [vmem:[%s2 + $0x80] sm:$0xff]
  %v226 = vld [vmem:[%s2 + $0x88] sm:$0xff]
  %v227 = vld [vmem:[%s2 + $0x90] sm:$0xff]
  %v228 = vld [vmem:[%s2 + $0x98] sm:$0xff]
  %v229 = vld [vmem:[%s2 + $0xa0] sm:$0xff]
  %v230 = vld [vmem:[%s2 + $0xa8] sm:$0xff]
  %v231 = vld [vmem:[%s2 + $0xb0] sm:$0xff]
  %v232 = vld [vmem:[%s2 + $0xb8] sm:$0xff]
  %v233 = vld [vmem:[%s2 + $0xc0] sm:$0xff]
  %v234 = vld [vmem:[%s2 + $0xc8] sm:$0xff]
  %v235 = vld [vmem:[%s2 + $0xd0] sm:$0xff]
  %v236 = vld [vmem:[%s2 + $0xd8] sm:$0xff]
  %v237 = vld [vmem:[%s2 + $0xe0] sm:$0xff]
  %v238 = vld [vmem:[%s2 + $0xe8] sm:$0xff]
  %v239 = vld [vmem:[%s2 + $0xf0] sm:$0xff]
  %v240 = vld [vmem:[%s2 + $0xf8] sm:$0xff]
  %v241 = vld [vmem:[%s2 + $0x100] sm:$0xff]
  %v242 = vld [vmem:[%s2 + $0x108] sm:$0xff]
  %v243 = vld [vmem:[%s2 + $0x110] sm:$0xff]
  %v244 = vld [vmem:[%s2 + $0x118] sm:$0xff]
  %v245 = vld [vmem:[%s2 + $0x120] sm:$0xff]
  %v246 = vld [vmem:[%s2 + $0x128] sm:$0xff]
  %v247 = vld [vmem:[%s2 + $0x130] sm:$0xff]
  %v248 = vld [vmem:[%s2 + $0x138] sm:$0xff]
  %v249 = vld [vmem:[%s2 + $0x140] sm:$0xff]
  %v250 = vld [vmem:[%s2 + $0x148] sm:$0xff]
  %v251 = vld [vmem:[%s2 + $0x150] sm:$0xff]
  %v252 = vld [vmem:[%s2 + $0x158] sm:$0xff]
  %v253 = vld [vmem:[%s2 + $0x160] sm:$0xff]
  %v254 = vld [vmem:[%s2 + $0x168] sm:$0xff]
  %v255 = vld [vmem:[%s2 + $0x170] sm:$0xff]
  %v256 = vld [vmem:[%s2 + $0x178] sm:$0xff]
  %v257 = vld [vmem:[%s2 + $0x180] sm:$0xff]
  %v258 = vld [vmem:[%s2 + $0x188] sm:$0xff]
  %v259 = vld [vmem:[%s2 + $0x190] sm:$0xff]
  %v260 = vld [vmem:[%s2 + $0x198] sm:$0xff]
  %v261 = vld [vmem:[%s2 + $0x1a0] sm:$0xff]
  %v262 = vld [vmem:[%s2 + $0x1a8] sm:$0xff]
  %v263 = vld [vmem:[%s2 + $0x1b0] sm:$0xff]
  %v264 = vld [vmem:[%s2 + $0x1b8] sm:$0xff]
  %v265 = vld [vmem:[%s2 + $0x1c0] sm:$0xff]
  %v266 = vld [vmem:[%s2 + $0x1c8] sm:$0xff]
  %v267 = vld [vmem:[%s2 + $0x1d0] sm:$0xff]
  %v268 = vld [vmem:[%s2 + $0x1d8] sm:$0xff]
  %v269 = vld [vmem:[%s2 + $0x1e0] sm:$0xff]
  %v270 = vld [vmem:[%s2 + $0x1e8] sm:$0xff]
  %v271 = vld [vmem:[%s2 + $0x1f0] sm:$0xff]
  %v272 = vld [vmem:[%s2 + $0x1f8] sm:$0xff]
  %v273 = vld [vmem:[%s2 + $0x200] sm:$0xff]
  %v274 = vld [vmem:[%s2 + $0x208] sm:$0xff]
  %v275 = vld [vmem:[%s2 + $0x210] sm:$0xff]
  %v276 = vld [vmem:[%s2 + $0x218] sm:$0xff]
  %v277 = vld [vmem:[%s2 + $0x220] sm:$0xff]
  %v278 = vld [vmem:[%s2 + $0x228] sm:$0xff]
  %v279 = vld [vmem:[%s2 + $0x230] sm:$0xff]
  %v280 = vld [vmem:[%s2 + $0x238] sm:$0xff]
  %v281 = vld [vmem:[%s2 + $0x240] sm:$0xff]
  %v282 = vld [vmem:[%s2 + $0x248] sm:$0xff]
  %v283 = vld [vmem:[%s2 + $0x250] sm:$0xff]
  %v284 = vld [vmem:[%s2 + $0x258] sm:$0xff]
  %v285 = vld [vmem:[%s2 + $0x260] sm:$0xff]
  %v286 = vld [vmem:[%s2 + $0x268] sm:$0xff]
  %v287 = vld [vmem:[%s2 + $0x270] sm:$0xff]
  %v288 = vld [vmem:[%s2 + $0x278] sm:$0xff]
  %v289 = vld [vmem:[%s2 + $0x280] sm:$0xff]
  %v290 = vld [vmem:[%s2 + $0x288] sm:$0xff]
  %v291 = vld [vmem:[%s2 + $0x290] sm:$0xff]
  %v292 = vld [vmem:[%s2 + $0x298] sm:$0xff]
  %v293 = vld [vmem:[%s2 + $0x2a0] sm:$0xff]
  %v294 = vld [vmem:[%s2 + $0x2a8] sm:$0xff]
  %v295 = vld [vmem:[%s2 + $0x2b0] sm:$0xff]
  %v296 = vld [vmem:[%s2 + $0x2b8] sm:$0xff]
  %v297 = vld [vmem:[%s2 + $0x2c0] sm:$0xff]
  %v298 = vld [vmem:[%s2 + $0x2c8] sm:$0xff]
  %v299 = vld [vmem:[%s2 + $0x2d0] sm:$0xff]
  %v300 = vld [vmem:[%s2 + $0x2d8] sm:$0xff]
  %v301 = vld [vmem:[%s2 + $0x2e0] sm:$0xff]
  %v302 = vld [vmem:[%s2 + $0x2e8] sm:$0xff]
  %v303 = vld [vmem:[%s2 + $0x2f0] sm:$0xff]
  %v304 = vld [vmem:[%s2 + $0x2f8] sm:$0xff]
  %v305 = vld [vmem:[%s2 + $0x300] sm:$0xff]
  %v306 = vld [vmem:[%s2 + $0x308] sm:$0xff]
  %v307 = vld [vmem:[%s2 + $0x310] sm:$0xff]
  %v308 = vld [vmem:[%s2 + $0x318] sm:$0xff]
  %v309 = vld [vmem:[%s2 + $0x320] sm:$0xff]
  %v310 = vld [vmem:[%s2 + $0x328] sm:$0xff]
  %v311 = vld [vmem:[%s2 + $0x330] sm:$0xff]
  %v312 = vld [vmem:[%s2 + $0x338] sm:$0xff]
  %v313 = vld [vmem:[%s2 + $0x340] sm:$0xff]
  %v314 = vld [vmem:[%s2 + $0x348] sm:$0xff]
  %v315 = vld [vmem:[%s2 + $0x350] sm:$0xff]
  %v316 = vld [vmem:[%s2 + $0x358] sm:$0xff]
  %v317 = vld [vmem:[%s2 + $0x360] sm:$0xff]
  %v318 = vld [vmem:[%s2 + $0x368] sm:$0xff]
  %v319 = vld [vmem:[%s2 + $0x370] sm:$0xff]
  %v320 = vld [vmem:[%s2 + $0x378] sm:$0xff]
  %v321 = vld [vmem:[%s2 + $0x380] sm:$0xff]
  %v322 = vld [vmem:[%s2 + $0x388] sm:$0xff]
  %v323 = vld [vmem:[%s2 + $0x390] sm:$0xff]
  %v324 = vld [vmem:[%s2 + $0x398] sm:$0xff]
  %v325 = vld [vmem:[%s2 + $0x3a0] sm:$0xff]
  %v326 = vld [vmem:[%s2 + $0x3a8] sm:$0xff]
  %v327 = vld [vmem:[%s2 + $0x3b0] sm:$0xff]
  %v328 = vld [vmem:[%s2 + $0x3b8] sm:$0xff]
  %v329 = vld [vmem:[%s2 + $0x3c0] sm:$0xff]
  %v330 = vld [vmem:[%s2 + $0x3c8] sm:$0xff]
  %v331 = vld [vmem:[%s2 + $0x3d0] sm:$0xff]
  %v332 = vld [vmem:[%s2 + $0x3d8] sm:$0xff]
  %v333 = vld [vmem:[%s2 + $0x3e0] sm:$0xff]
  %v334 = vld [vmem:[%s2 + $0x3e8] sm:$0xff]
  %v335 = vld [vmem:[%s2 + $0x3f0] sm:$0xff]
  %v336 = vld [vmem:[%s2 + $0x3f8] sm:$0xff]
  %337 = vmatprep.subr.mxu0 %v210
  %338 = vmatpush1.msra.mxu0 %v209
  %339 = vmatprep.subr.mxu0 %v212
  %340 = vmatpush1.msra.mxu0 %v211
  %341 = vmatprep.subr.mxu0 %v214
  %342 = vmatpush1.msra.mxu0 %v213
  %343 = vmatprep.subr.mxu0 %v216
  %344 = vmatpush1.msra.mxu0 %v215
  %345 = vmatprep.subr.mxu0 %v218
  %346 = vmatpush1.msra.mxu0 %v217
  %347 = vmatprep.subr.mxu0 %v220
  %348 = vmatpush1.msra.mxu0 %v219
  %349 = vmatprep.subr.mxu0 %v222
  %350 = vmatpush1.msra.mxu0 %v221
  %351 = vmatprep.subr.mxu0 %v224
  %352 = vmatpush1.msra.mxu0 %v223
  %353 = vmatprep.subr.mxu0 %v226
  %354 = vmatpush1.msra.mxu0 %v225
  %355 = vmatprep.subr.mxu0 %v228
  %356 = vmatpush1.msra.mxu0 %v227
  %357 = vmatprep.subr.mxu0 %v230
  %358 = vmatpush1.msra.mxu0 %v229
  %359 = vmatprep.subr.mxu0 %v232
  %360 = vmatpush1.msra.mxu0 %v231
  %361 = vmatprep.subr.mxu0 %v234
  %362 = vmatpush1.msra.mxu0 %v233
  %363 = vmatprep.subr.mxu0 %v236
  %364 = vmatpush1.msra.mxu0 %v235
  %365 = vmatprep.subr.mxu0 %v238
  %366 = vmatpush1.msra.mxu0 %v237
  %367 = vmatprep.subr.mxu0 %v240
  %368 = vmatpush1.msra.mxu0 %v239
  %369 = vmatprep.subr.mxu0 %v242
  %370 = vmatpush1.msra.mxu0 %v241
  %371 = vmatprep.subr.mxu0 %v244
  %372 = vmatpush1.msra.mxu0 %v243
  %373 = vmatprep.subr.mxu0 %v246
  %374 = vmatpush1.msra.mxu0 %v245
  %375 = vmatprep.subr.mxu0 %v248
  %376 = vmatpush1.msra.mxu0 %v247
  %377 = vmatprep.subr.mxu0 %v250
  %378 = vmatpush1.msra.mxu0 %v249
  %379 = vmatprep.subr.mxu0 %v252
  %380 = vmatpush1.msra.mxu0 %v251
  %381 = vmatprep.subr.mxu0 %v254
  %382 = vmatpush1.msra.mxu0 %v253
  %383 = vmatprep.subr.mxu0 %v256
  %384 = vmatpush1.msra.mxu0 %v255
  %385 = vmatprep.subr.mxu0 %v258
  %386 = vmatpush1.msra.mxu0 %v257
  %387 = vmatprep.subr.mxu0 %v260
  %388 = vmatpush1.msra.mxu0 %v259
  %389 = vmatprep.subr.mxu0 %v262
  %390 = vmatpush1.msra.mxu0 %v261
  %391 = vmatprep.subr.mxu0 %v264
  %392 = vmatpush1.msra.mxu0 %v263
  %393 = vmatprep.subr.mxu0 %v266
  %394 = vmatpush1.msra.mxu0 %v265
  %395 = vmatprep.subr.mxu0 %v268
  %396 = vmatpush1.msra.mxu0 %v267
  %397 = vmatprep.subr.mxu0 %v270
  %398 = vmatpush1.msra.mxu0 %v269
  %399 = vmatprep.subr.mxu0 %v272
  %400 = vmatpush1.msra.mxu0 %v271
  %401 = vmatprep.mubr.f32.mxu0 %v120
  %402 = vmatmul.mubr.f32.gmra.mrb[0].mxu0 %v188
  %v403 = vpop.f32.mrb[0].mxu0
  %v404 = vadd.f32 0.0, %v403
  %v405 = vpop.f32.mrb[0].mxu0
  %v406 = vadd.f32 0.0, %v405
  %407 = vmatprep.mubr.f32.mxu0 %v126
  %408 = vmatmul.mubr.f32.gmra.mrb[0].mxu0 %v189
  %v409 = vpop.f32.mrb[0].mxu0
  %v410 = vadd.f32 0.0, %v409
  %v411 = vpop.f32.mrb[0].mxu0
  %v412 = vadd.f32 0.0, %v411
  %413 = vmatprep.mubr.f32.mxu0 %v132
  %414 = vmatmul.mubr.f32.gmra.mrb[0].mxu0 %v190
  %v415 = vpop.f32.mrb[0].mxu0
  %v416 = vadd.f32 0.0, %v415
  %v417 = vpop.f32.mrb[0].mxu0
  %v418 = vadd.f32 0.0, %v417
  %419 = vmatprep.mubr.f32.mxu0 %v138
  %420 = vmatmul.mubr.f32.gmra.mrb[0].mxu0 %v191
  %v421 = vpop.f32.mrb[0].mxu0
  %v422 = vadd.f32 0.0, %v421
  %v423 = vpop.f32.mrb[0].mxu0
  %v424 = vadd.f32 0.0, %v423
  %425 = vdwg.mxu0
  %426 = vmatprep.subr.mxu0 %v274
  %427 = vmatpush1.msra.mxu0 %v273
  %428 = vmatprep.subr.mxu0 %v276
  %429 = vmatpush1.msra.mxu0 %v275
  %430 = vmatprep.subr.mxu0 %v278
  %431 = vmatpush1.msra.mxu0 %v277
  %432 = vmatprep.subr.mxu0 %v280
  %433 = vmatpush1.msra.mxu0 %v279
  %434 = vmatprep.subr.mxu0 %v282
  %435 = vmatpush1.msra.mxu0 %v281
  %436 = vmatprep.subr.mxu0 %v284
  %437 = vmatpush1.msra.mxu0 %v283
  %438 = vmatprep.subr.mxu0 %v286
  %439 = vmatpush1.msra.mxu0 %v285
  %440 = vmatprep.subr.mxu0 %v288
  %441 = vmatpush1.msra.mxu0 %v287
  %442 = vmatprep.subr.mxu0 %v290
  %443 = vmatpush1.msra.mxu0 %v289
  %444 = vmatprep.subr.mxu0 %v292
  %445 = vmatpush1.msra.mxu0 %v291
  %446 = vmatprep.subr.mxu0 %v294
  %447 = vmatpush1.msra.mxu0 %v293
  %448 = vmatprep.subr.mxu0 %v296
  %449 = vmatpush1.msra.mxu0 %v295
  %450 = vmatprep.subr.mxu0 %v298
  %451 = vmatpush1.msra.mxu0 %v297
  %452 = vmatprep.subr.mxu0 %v300
  %453 = vmatpush1.msra.mxu0 %v299
  %454 = vmatprep.subr.mxu0 %v302
  %455 = vmatpush1.msra.mxu0 %v301
  %456 = vmatprep.subr.mxu0 %v304
  %457 = vmatpush1.msra.mxu0 %v303
  %458 = vmatprep.subr.mxu0 %v306
  %459 = vmatpush1.msra.mxu0 %v305
  %460 = vmatprep.subr.mxu0 %v308
  %461 = vmatpush1.msra.mxu0 %v307
  %462 = vmatprep.subr.mxu0 %v310
  %463 = vmatpush1.msra.mxu0 %v309
  %464 = vmatprep.subr.mxu0 %v312
  %465 = vmatpush1.msra.mxu0 %v311
  %466 = vmatprep.subr.mxu0 %v314
  %467 = vmatpush1.msra.mxu0 %v313
  %468 = vmatprep.subr.mxu0 %v316
  %469 = vmatpush1.msra.mxu0 %v315
  %470 = vmatprep.subr.mxu0 %v318
  %471 = vmatpush1.msra.mxu0 %v317
  %472 = vmatprep.subr.mxu0 %v320
  %473 = vmatpush1.msra.mxu0 %v319
  %474 = vmatprep.subr.mxu0 %v322
  %475 = vmatpush1.msra.mxu0 %v321
  %476 = vmatprep.subr.mxu0 %v324
  %477 = vmatpush1.msra.mxu0 %v323
  %478 = vmatprep.subr.mxu0 %v326
  %479 = vmatpush1.msra.mxu0 %v325
  %480 = vmatprep.subr.mxu0 %v328
  %481 = vmatpush1.msra.mxu0 %v327
  %482 = vmatprep.subr.mxu0 %v330
  %483 = vmatpush1.msra.mxu0 %v329
  %484 = vmatprep.subr.mxu0 %v332
  %485 = vmatpush1.msra.mxu0 %v331
  %486 = vmatprep.subr.mxu0 %v334
  %487 = vmatpush1.msra.mxu0 %v333
  %488 = vmatprep.subr.mxu0 %v336
  %489 = vmatpush1.msra.mxu0 %v335
  %490 = vmatprep.mubr.f32.mxu0 %v205
  %491 = vmatmul.mubr.f32.gmra.mrb[0].mxu0 %v122
  %v492 = vpop.f32.mrb[0].mxu0
  %v493 = vadd.f32 %v404, %v492
  %v494 = vpop.f32.mrb[0].mxu0
  %v495 = vadd.f32 %v406, %v494
  %496 = vmatprep.mubr.f32.mxu0 %v206
  %497 = vmatmul.mubr.f32.gmra.mrb[0].mxu0 %v128
  %v498 = vpop.f32.mrb[0].mxu0
  %v499 = vadd.f32 %v410, %v498
  %v500 = vpop.f32.mrb[0].mxu0
  %v501 = vadd.f32 %v412, %v500
  %502 = vmatprep.mubr.f32.mxu0 %v207
  %503 = vmatmul.mubr.f32.gmra.mrb[0].mxu0 %v134
  %v504 = vpop.f32.mrb[0].mxu0
  %v505 = vadd.f32 %v416, %v504
  %v506 = vpop.f32.mrb[0].mxu0
  %v507 = vadd.f32 %v418, %v506
  %508 = vmatprep.mubr.f32.mxu0 %v208
  %509 = vmatmul.mubr.f32.gmra.mrb[0].mxu0 %v140
  %v510 = vpop.f32.mrb[0].mxu0
  %v511 = vadd.f32 %v422, %v510
  %v512 = vpop.f32.mrb[0].mxu0
  %v513 = vadd.f32 %v424, %v512
  %514 = vdwg.mxu0
  %v515 = vld [vmem:[%s3] sm:$0xff]
  %v516 = vld [vmem:[%s3 + $0x8] sm:$0xff]
  %v517 = vld [vmem:[%s3 + $0x10] sm:$0xff]
  %v518 = vld [vmem:[%s3 + $0x18] sm:$0xff]
  %v519 = vadd.f32 %v493, %v515
  %v520 = vadd.f32 %v495, %v516
  %v521 = vadd.f32 %v499, %v517
  %v522 = vadd.f32 %v501, %v518
  %v523 = vadd.f32 %v505, %v515
  %v524 = vadd.f32 %v507, %v516
  %v525 = vadd.f32 %v511, %v517
  %v526 = vadd.f32 %v513, %v518
  %527 = vst [vmem:[%s4] sm:$0xff] %v519
  %528 = vst [vmem:[%s4 + $0x8] sm:$0xff] %v520
  %529 = vst [vmem:[%s4 + $0x10] sm:$0xff] %v521
  %530 = vst [vmem:[%s4 + $0x18] sm:$0xff] %v522
  %531 = vst [vmem:[%s4 + $0x20] sm:$0xff] %v523
  %532 = vst [vmem:[%s4 + $0x28] sm:$0xff] %v524
  %533 = vst [vmem:[%s4 + $0x30] sm:$0xff] %v525
  %534 = vst [vmem:[%s4 + $0x38] sm:$0xff] %v526
  // Predicated region
  $region18: #{upsample_layer.1} parent=0 // pred_check
    _
  $region19: #{upsample_layer.1} parent=0 // pred_check_branch
    %536 = sbr.rel (0) target = $region21
  $region20: #{upsample_layer.1} parent=0 // pred_region
    _
  $region21: #{upsample_layer.1} parent=0 // pred_fallthru
    _
  // Predicated region
  $region22: #{upsample_layer.1} parent=0 // pred_check
    _
  $region23: #{upsample_layer.1} parent=0 // pred_check_branch
    %538 = sbr.rel (0) target = $region25
  $region24: #{upsample_layer.1} parent=0 // pred_region
    _
  $region25: #{upsample_layer.1} parent=0 // pred_fallthru
    _

</llo_original>
